<compile_context>
chip_gen: v5e
topology: v5e:2x2
jax: 0.10.0
libtpu: 0.0.40
codegen_flags: <defaults>
</compile_context>

<pallas_src>
import jax
import jax.numpy as jnp
from jax.experimental import pallas as pl
from jax.experimental.pallas import tpu as pltpu


def add_conv1x1_kernel(a_ref, b_ref, w_ref, o_ref):
    # a_ref, b_ref: (Cin, HW) activations (resident across Cout tiles)
    # w_ref:        (tc, Cin) weight tile
    # o_ref:        (tc, HW)  output tile
    x = a_ref[...] + b_ref[...]                                   # fused elementwise add
    o_ref[...] = jnp.dot(w_ref[...], x,
                         preferred_element_type=jnp.float32)      # MXU matmul


def add_conv1x1(x396, x382, weight):
    """x396, x382: (N, Cin, H, W) float32.  weight: (Cout, Cin, 1, 1) float32."""
    N, Cin, H, W = x396.shape
    Cout = weight.shape[0]
    HW = H * W

    # Free reshapes (row-major NCHW): no transposes.
    a = x396.reshape(N, Cin, HW)
    b = x382.reshape(N, Cin, HW)
    w = weight.reshape(Cout, Cin)

    # Tile Cout into a few blocks (rows multiple of 8) for pipelining / megacore.
    cout_blocks = 4
    while Cout % cout_blocks != 0 or (Cout // cout_blocks) % 8 != 0:
        cout_blocks //= 2
        if cout_blocks == 1:
            break
    tc = Cout // cout_blocks

    out_flat = pl.pallas_call(
        add_conv1x1_kernel,
        out_shape=jax.ShapeDtypeStruct((N, Cout, HW), jnp.float32),
        grid=(N, cout_blocks),
        in_specs=[
            # Activations: batch dim squeezed out; same block across Cout tiles
            # (Pallas skips the re-DMA when the block index is unchanged).
            pl.BlockSpec((None, Cin, HW), lambda n, i: (n, 0, 0)),
            pl.BlockSpec((None, Cin, HW), lambda n, i: (n, 0, 0)),
            # Weight: one Cout-row slab per grid step.
            pl.BlockSpec((tc, Cin), lambda n, i: (i, 0)),
        ],
        # Output tile is lane-dense (last dim = full HW), no sub-128 splitting.
        out_specs=pl.BlockSpec((None, tc, HW), lambda n, i: (n, i, 0)),
        compiler_params=pltpu.CompilerParams(
            dimension_semantics=("parallel", "parallel")),
    )(a, b, w)

    return out_flat.reshape(N, Cout, H, W)


if __name__ == "__main__":
    key = jax.random.PRNGKey(0)
    k1, k2, k3 = jax.random.split(key, 3)

    N, Cin, H, W = 1, 176, 14, 14
    Cout = 1056

    x396 = jax.random.normal(k1, (N, Cin, H, W), dtype=jnp.float32)
    x382 = jax.random.normal(k2, (N, Cin, H, W), dtype=jnp.float32)
    # Deterministic conv weight, shape matches nn.Conv2d(176, 1056, 1, bias=False)
    weight = jax.random.normal(k3, (Cout, Cin, 1, 1), dtype=jnp.float32) * 0.05

    out = add_conv1x1(x396, x382, weight)
    out = jax.block_until_ready(out)

    # Reference check with plain JAX (NCHW 1x1 conv == matmul over channels)
    ref = jnp.einsum('nchw,oc->nohw', x396 + x382, weight.reshape(Cout, Cin))
    assert out.shape == (N, Cout, H, W), out.shape
    assert jnp.allclose(out, ref, atol=1e-3, rtol=1e-3)

    print("KERNEL_OK")
</pallas_src>

<mosaic_0001>
module attributes {stable_mosaic.version = 11 : i64} {
  func.func @add_conv1x1_kernel(%arg0: i32, %arg1: i32, %arg2: memref<1x176x196xf32, #tpu.memory_space<vmem>>, %arg3: memref<1x176x196xf32, #tpu.memory_space<vmem>>, %arg4: memref<264x176xf32, #tpu.memory_space<vmem>>, %arg5: memref<1x264x196xf32, #tpu.memory_space<vmem>>) attributes {dimension_semantics = [#tpu.dimension_semantics<parallel>, #tpu.dimension_semantics<parallel>], iteration_bounds = array<i64: 1, 4>, scalar_prefetch = 0 : i64, scratch_operands = 0 : i64, tpu.core_type = #tpu.core_type<tc>, window_params = [{transform_indices = @transform_0, window_bounds = array<i64: 1, 176, 196>}, {transform_indices = @transform_1, window_bounds = array<i64: 1, 176, 196>}, {transform_indices = @transform_2, window_bounds = array<i64: 264, 176>}, {transform_indices = @transform_3, window_bounds = array<i64: 1, 264, 196>}]} {
    %c0 = arith.constant 0 : index
    %c0_0 = arith.constant 0 : index
    %c0_1 = arith.constant 0 : index
    %0 = vector.load %arg2[%c0, %c0_0, %c0_1] : memref<1x176x196xf32, #tpu.memory_space<vmem>>, vector<1x176x196xf32>
    %1 = vector.shape_cast %0 : vector<1x176x196xf32> to vector<176x196xf32>
    %c0_2 = arith.constant 0 : index
    %c0_3 = arith.constant 0 : index
    %c0_4 = arith.constant 0 : index
    %2 = vector.load %arg3[%c0_2, %c0_3, %c0_4] : memref<1x176x196xf32, #tpu.memory_space<vmem>>, vector<1x176x196xf32>
    %3 = vector.shape_cast %2 : vector<1x176x196xf32> to vector<176x196xf32>
    %4 = arith.addf %1, %3 : vector<176x196xf32>
    %c0_5 = arith.constant 0 : index
    %c0_6 = arith.constant 0 : index
    %5 = vector.load %arg4[%c0_5, %c0_6] : memref<264x176xf32, #tpu.memory_space<vmem>>, vector<264x176xf32>
    %cst = arith.constant dense<0.000000e+00> : vector<264x196xf32>
    %6 = tpu.matmul %5, %4, %cst {dimension_numbers = #tpu.dot_dimension_numbers<[1], [0], [0], [1], [0, 0, 1, 1], [], []>} : vector<264x176xf32>, vector<176x196xf32>, vector<264x196xf32> -> vector<264x196xf32>
    %c0_7 = arith.constant 0 : index
    %c0_8 = arith.constant 0 : index
    %c0_9 = arith.constant 0 : index
    %7 = vector.load %arg5[%c0_7, %c0_8, %c0_9] : memref<1x264x196xf32, #tpu.memory_space<vmem>>, vector<1x264x196xf32>
    %8 = vector.shape_cast %7 : vector<1x264x196xf32> to vector<264x196xf32>
    %9 = vector.shape_cast %6 : vector<264x196xf32> to vector<1x264x196xf32>
    tpu.vector_store %arg5[%c0_7, %c0_8, %c0_9], %9 {strides = array<i32>} : memref<1x264x196xf32, #tpu.memory_space<vmem>>, vector<1x264x196xf32>,
    return
  }
  func.func @transform_0(%arg0: i32, %arg1: i32) -> (i32, i32, i32) {
    %c0_i32 = arith.constant 0 : i32
    %c0_i32_0 = arith.constant 0 : i32
    %c0_i32_1 = arith.constant 0 : i32
    return %arg0, %c0_i32, %c0_i32_0 : i32, i32, i32
  }
  func.func @transform_1(%arg0: i32, %arg1: i32) -> (i32, i32, i32) {
    %c0_i32 = arith.constant 0 : i32
    %c0_i32_0 = arith.constant 0 : i32
    %c0_i32_1 = arith.constant 0 : i32
    return %arg0, %c0_i32, %c0_i32_0 : i32, i32, i32
  }
  func.func @transform_2(%arg0: i32, %arg1: i32) -> (i32, i32) {
    %c0_i32 = arith.constant 0 : i32
    %c0_i32_0 = arith.constant 0 : i32
    return %arg1, %c0_i32 : i32, i32
  }
  func.func @transform_3(%arg0: i32, %arg1: i32) -> (i32, i32, i32) {
    %c0_i32 = arith.constant 0 : i32
    %c0_i32_0 = arith.constant 0 : i32
    return %arg0, %arg1, %c0_i32 : i32, i32, i32
  }
}

</mosaic_0001>

<llo_original>
// kernel: tpu_custom_call.1
$region0: #{tpu_custom_call.1}
  #allocation0 [shape = 'u32[]', space=smem, size = 0x4, offset = 0x4, fixed_abs, tag = 'smem constant byte address 0x4 - core index']
  #allocation1 [shape = 'u32[72,128]{1,0:T(1,128)}', space=vmem, size = 0x9000, scoped, tag = 'internal scratch']
  %s0 = inlined_call_operand.vmem [shape: f32[1,176,196], index: 0, kind: input, shape index: {}]
  %s1 = inlined_call_operand.vmem [shape: f32[1,176,196], index: 1, kind: input, shape index: {}]
  %s2 = inlined_call_operand.vmem [shape: f32[1056,176], index: 2, kind: input, shape index: {}]
  %s3 = inlined_call_operand.vmem [shape: f32[1,1056,196], index: 3, kind: output, shape index: {}]
  %s4 = sld [smem:[#allocation0]]
  $region45: #{tpu_custom_call.1} parent=0
    _
  %s6 = ssub.s32 1, %s4
  %s7 = scalar_select 0, %s6, %s4
  loop: start=0, step=1, limit=6
  $region2: #{tpu_custom_call.1} parent=0 // loop_pre_header
    _
  $region3: #{tpu_custom_call.1} parent=0 // loop_header
    %s9 = sphi 0, %s13
    %p10 = scmp.ge.s32.totalorder %s9, 6
    %s16 = sphi 0, %s28
    %s17 = sphi 0, %s24
    %s18 = sphi 0, %s16
    %s19 = sphi 0, %s17
    %s20 = sphi 0, %s18
    %s21 = sphi 0, %s19
    %s31 = sphi 0, %s33
    %s34 = sphi 0, %s31
    %s35 = sphi 0, %s34
    %s51 = sphi 0, %s35
    %s57 = sphi 0, %s59
    %s60 = sphi 0, %s57
    %s61 = sphi 0, %s60
    %s77 = sphi 0, %s61
    %s83 = sphi 0, %s85
    %s86 = sphi 0, %s83
    %s87 = sphi 0, %s86
    %s103 = sphi 0, %s87
    %s111 = sphi 0, %s113
    %s114 = sphi 0, %s111
    %s115 = sphi 0, %s114
    %s131 = sphi 0, %s115
  $region4: #{tpu_custom_call.1} parent=0 // loop_header_branch
    %12 = sbr.rel (%p10) target = $region8
  $region5: #{tpu_custom_call.1} parent=0 // loop_body
    %s14 = ssub.s32 %s9, 1
    %s15 = ssub.s32 %s9, 2
    %s22 = sadd.s32 1, %s17
    %p23 = scmp.ge.s32.totalorder %s22, 4
    %s24 = scalar_select %p23, 0, %s22
    %s25 = sadd.s32 1, %s16
    %s26 = scalar_select %p23, %s25, %s16
    %p27 = scmp.ge.s32.totalorder %s26, 1
    %s28 = scalar_select %p27, 0, %s26
    %s29 = ssub.s32 %s16, %s28
    %p30 = scmp.eq.s32.totalorder %s29, 0
    %s32 = sadd.s32 %s31, 1
    %s33 = scalar_select %p30, %s31, %s32
    %p36 = pneg %p30
    %p37 = scmp.eq.s32.totalorder %s9, 3
    %p38 = por %p36, %p37
    %p39 = scmp.ne.s32.totalorder %s31, %s34
    %p40 = scmp.eq.s32.totalorder %s9, 0
    %p41 = por %p39, %p40
    %p42 = scmp.ne.s32.totalorder %s31, %s34
    %p43 = scmp.eq.s32.totalorder %s14, 3
    %p44 = por %p42, %p43
    %p45 = scmp.ne.s32.totalorder %s34, %s35
    %p46 = scmp.eq.s32.totalorder %s14, 0
    %p47 = por %p45, %p46
    %p48 = scmp.ne.s32.totalorder %s34, %s35
    %p49 = scmp.eq.s32.totalorder %s15, 3
    %p50 = por %p48, %p49
    %p52 = scmp.ne.s32.totalorder %s35, %s51
    %p53 = scmp.eq.s32.totalorder %s15, 0
    %p54 = por %p52, %p53
    %s55 = ssub.s32 %s16, %s28
    %p56 = scmp.eq.s32.totalorder %s55, 0
    %s58 = sadd.s32 %s57, 1
    %s59 = scalar_select %p56, %s57, %s58
    %p62 = pneg %p56
    %p63 = scmp.eq.s32.totalorder %s9, 3
    %p64 = por %p62, %p63
    %p65 = scmp.ne.s32.totalorder %s57, %s60
    %p66 = scmp.eq.s32.totalorder %s9, 0
    %p67 = por %p65, %p66
    %p68 = scmp.ne.s32.totalorder %s57, %s60
    %p69 = scmp.eq.s32.totalorder %s14, 3
    %p70 = por %p68, %p69
    %p71 = scmp.ne.s32.totalorder %s60, %s61
    %p72 = scmp.eq.s32.totalorder %s14, 0
    %p73 = por %p71, %p72
    %p74 = scmp.ne.s32.totalorder %s60, %s61
    %p75 = scmp.eq.s32.totalorder %s15, 3
    %p76 = por %p74, %p75
    %p78 = scmp.ne.s32.totalorder %s61, %s77
    %p79 = scmp.eq.s32.totalorder %s15, 0
    %p80 = por %p78, %p79
    %s81 = ssub.s32 %s17, %s24
    %p82 = scmp.eq.s32.totalorder %s81, 0
    %s84 = sadd.s32 %s83, 1
    %s85 = scalar_select %p82, %s83, %s84
    %p88 = pneg %p82
    %p89 = scmp.eq.s32.totalorder %s9, 3
    %p90 = por %p88, %p89
    %p91 = scmp.ne.s32.totalorder %s83, %s86
    %p92 = scmp.eq.s32.totalorder %s9, 0
    %p93 = por %p91, %p92
    %p94 = scmp.ne.s32.totalorder %s83, %s86
    %p95 = scmp.eq.s32.totalorder %s14, 3
    %p96 = por %p94, %p95
    %p97 = scmp.ne.s32.totalorder %s86, %s87
    %p98 = scmp.eq.s32.totalorder %s14, 0
    %p99 = por %p97, %p98
    %p100 = scmp.ne.s32.totalorder %s86, %s87
    %p101 = scmp.eq.s32.totalorder %s15, 3
    %p102 = por %p100, %p101
    %p104 = scmp.ne.s32.totalorder %s87, %s103
    %p105 = scmp.eq.s32.totalorder %s15, 0
    %p106 = por %p104, %p105
    %s107 = ssub.s32 %s16, %s28
    %s108 = ssub.s32 %s17, %s24
    %s109 = sor.u32 %s107, %s108
    %p110 = scmp.eq.s32.totalorder %s109, 0
    %s112 = sadd.s32 %s111, 1
    %s113 = scalar_select %p110, %s111, %s112
    %p116 = pneg %p110
    %p117 = scmp.eq.s32.totalorder %s9, 3
    %p118 = por %p116, %p117
    %p119 = scmp.ne.s32.totalorder %s111, %s114
    %p120 = scmp.eq.s32.totalorder %s9, 0
    %p121 = por %p119, %p120
    %p122 = scmp.ne.s32.totalorder %s111, %s114
    %p123 = scmp.eq.s32.totalorder %s14, 3
    %p124 = por %p122, %p123
    %p125 = scmp.ne.s32.totalorder %s114, %s115
    %p126 = scmp.eq.s32.totalorder %s14, 0
    %p127 = por %p125, %p126
    %p128 = scmp.ne.s32.totalorder %s114, %s115
    %p129 = scmp.eq.s32.totalorder %s15, 3
    %p130 = por %p128, %p129
    %p132 = scmp.ne.s32.totalorder %s115, %s131
    %p133 = scmp.eq.s32.totalorder %s15, 0
    %p134 = por %p132, %p133
    %p135 = scmp.le.s32.totalorder 1, %s9
    %p136 = scmp.lt.s32.totalorder %s9, 5
    %p137 = pnand %p135, %p136
    %p138 = pneg %p137
    // Predicated region
    $region9: #{tpu_custom_call.1} parent=5 // pred_check
      _
    $region10: #{tpu_custom_call.1} parent=5 // pred_check_branch
      %140 = sbr.rel (%p137) target = $region12
    $region11: #{tpu_custom_call.1} parent=5 // pred_region
      %s141 = ssub.s32 %s9, 1
      // Predicated region
      $region13: #{tpu_custom_call.1} parent=11 // pred_check
        %p142 = pneg %p47
      $region14: #{tpu_custom_call.1} parent=11 // pred_check_branch
        %144 = sbr.rel (%p142) target = $region16
      $region15: #{tpu_custom_call.1} parent=11 // pred_region
        %p145 = scmp.lt.s32.totalorder %s18, 0
        %s146 = scalar_select %p145, %s18, 0
        %s147 = smul.addr %s146, 44
        %s148 = smul.addr %s147, 8
        %s149 = scalar_lea.vmem %s0, %s148
      $region16: #{tpu_custom_call.1} parent=11 // pred_fallthru
        _
      // Predicated region
      $region17: #{tpu_custom_call.1} parent=11 // pred_check
        %p150 = pneg %p73
      $region18: #{tpu_custom_call.1} parent=11 // pred_check_branch
        %152 = sbr.rel (%p150) target = $region20
      $region19: #{tpu_custom_call.1} parent=11 // pred_region
        %p153 = scmp.lt.s32.totalorder %s18, 0
        %s154 = scalar_select %p153, %s18, 0
        %s155 = smul.addr %s154, 44
        %s156 = smul.addr %s155, 8
        %s157 = scalar_lea.vmem %s1, %s156
      $region20: #{tpu_custom_call.1} parent=11 // pred_fallthru
        _
    $region12: #{tpu_custom_call.1} parent=5 // pred_fallthru
      _
    %p158 = scmp.lt.s32.totalorder %s9, 4
    // Predicated region
    $region21: #{tpu_custom_call.1} parent=5 // pred_check
      %p159 = pneg %p158
    $region22: #{tpu_custom_call.1} parent=5 // pred_check_branch
      %161 = sbr.rel (%p159) target = $region24
    $region23: #{tpu_custom_call.1} parent=5 // pred_region
      // Predicated region
      $region25: #{tpu_custom_call.1} parent=23 // pred_check
        %p162 = pneg %p93
      $region26: #{tpu_custom_call.1} parent=23 // pred_check_branch
        %164 = sbr.rel (%p162) target = $region28
      $region27: #{tpu_custom_call.1} parent=23 // pred_region
        %s165 = smul.u32 33, %s17
        %p166 = scmp.lt.s32.totalorder %s165, 131
        %s167 = scalar_select %p166, %s165, 131
        %s168 = smul.addr %s167, 2
        %s169 = smul.addr %s168, 8
        %s170 = scalar_lea.vmem %s2, %s169
        %s171 = smul.u32 33, %s17
      $region28: #{tpu_custom_call.1} parent=23 // pred_fallthru
        _
    $region24: #{tpu_custom_call.1} parent=5 // pred_fallthru
      _
    %p172 = scmp.le.s32.totalorder 1, %s9
    %p173 = scmp.lt.s32.totalorder %s9, 5
    %p174 = pnand %p172, %p173
    %p175 = pneg %p174
    // Predicated region
    $region29: #{tpu_custom_call.1} parent=5 // pred_check
      _
    $region30: #{tpu_custom_call.1} parent=5 // pred_check_branch
      %177 = sbr.rel (%p174) target = $region32
    $region31: #{tpu_custom_call.1} parent=5 // pred_region
      %s178 = ssub.s32 %s9, 1
      %p179 = scmp.lt.s32.totalorder %s18, 0
      %s180 = scalar_select %p179, %s18, 0
      %s181 = smul.addr %s180, 44
      %s182 = smul.addr %s181, 8
      %s183 = scalar_lea.vmem %s0, %s182
      %p184 = pneg %p47
      %p185 = pneg %p44
      %p186 = scmp.lt.s32.totalorder %s18, 0
      %s187 = scalar_select %p186, %s18, 0
      %s188 = smul.addr %s187, 44
      %s189 = smul.addr %s188, 8
      %s190 = scalar_lea.vmem %s1, %s189
      %p191 = pneg %p73
      %p192 = pneg %p70
      %s193 = smul.u32 33, %s19
      %p194 = scmp.lt.s32.totalorder %s193, 131
      %s195 = scalar_select %p194, %s193, 131
      %s196 = smul.addr %s195, 2
      %s197 = smul.addr %s196, 8
      %s198 = scalar_lea.vmem %s2, %s197
      %p199 = pneg %p99
      %p200 = pneg %p96
      %p201 = pneg %p127
      %p202 = pneg %p124
      %s203 = smul.u32 33, %s19
      %p204 = scmp.lt.s32.totalorder %s18, 0
      %s205 = scalar_select %p204, %s18, 0
      %p206 = scmp.lt.s32.totalorder %s203, 131
      %s207 = scalar_select %p206, %s203, 131
      %s208 = smul.addr %s207, 2
      %s209 = smul.addr %s205, 264
      %s210 = sadd.s32 %s208, %s209
      %s211 = smul.addr %s210, 8
      %s212 = scalar_lea.vmem %s3, %s211
      %p213 = scmp.lt.s32.totalorder %s18, 0
      %s214 = scalar_select %p213, %s18, 0
      %s215 = smul.addr %s214, 44
      %s216 = smul.addr %s215, 8
      %s217 = scalar_lea.vmem %s0, %s216
      %p218 = scmp.lt.s32.totalorder %s18, 0
      %s219 = scalar_select %p218, %s18, 0
      %s220 = smul.addr %s219, 44
      %s221 = smul.addr %s220, 8
      %s222 = scalar_lea.vmem %s1, %s221
      %s223 = smul.u32 33, %s19
      %p224 = scmp.lt.s32.totalorder %s223, 131
      %s225 = scalar_select %p224, %s223, 131
      %s226 = smul.addr %s225, 2
      %s227 = smul.addr %s226, 8
      %s228 = scalar_lea.vmem %s2, %s227
      %s229 = smul.u32 33, %s19
      %s230 = smul.u32 33, %s19
      %p231 = scmp.lt.s32.totalorder %s18, 0
      %s232 = scalar_select %p231, %s18, 0
      %p233 = scmp.lt.s32.totalorder %s230, 131
      %s234 = scalar_select %p233, %s230, 131
      %s235 = smul.addr %s234, 2
      %s236 = smul.addr %s232, 264
      %s237 = sadd.s32 %s235, %s236
      %s238 = smul.addr %s237, 8
      %s239 = scalar_lea.vmem %s3, %s238
      %s240 = smul.u32 33, %s19
      %v241 = vld [vmem:[%s217] sm:$0xff]
      %v242 = vld [vmem:[%s217 + $0x8] sm:$0xff]
      %v243 = vld [vmem:[%s217 + $0x10] sm:$0xff]
      %v244 = vld [vmem:[%s217 + $0x18] sm:$0xff]
      %v245 = vld [vmem:[%s217 + $0x20] sm:$0xff]
      %v246 = vld [vmem:[%s217 + $0x28] sm:$0xff]
      %v247 = vld [vmem:[%s217 + $0x30] sm:$0xff]
      %v248 = vld [vmem:[%s217 + $0x38] sm:$0xff]
      %v249 = vld [vmem:[%s217 + $0x40] sm:$0xff]
      %v250 = vld [vmem:[%s217 + $0x48] sm:$0xff]
      %v251 = vld [vmem:[%s217 + $0x50] sm:$0xff]
      %v252 = vld [vmem:[%s217 + $0x58] sm:$0xff]
      %v253 = vld [vmem:[%s217 + $0x60] sm:$0xff]
      %v254 = vld [vmem:[%s217 + $0x68] sm:$0xff]
      %v255 = vld [vmem:[%s217 + $0x70] sm:$0xff]
      %v256 = vld [vmem:[%s217 + $0x78] sm:$0xff]
      %v257 = vld [vmem:[%s217 + $0x80] sm:$0xff]
      %v258 = vld [vmem:[%s217 + $0x88] sm:$0xff]
      %v259 = vld [vmem:[%s217 + $0x90] sm:$0xff]
      %v260 = vld [vmem:[%s217 + $0x98] sm:$0xff]
      %v261 = vld [vmem:[%s217 + $0xa0] sm:$0xff]
      %v262 = vld [vmem:[%s217 + $0xa8] sm:$0xff]
      %v263 = vld [vmem:[%s217 + $0xb0] sm:$0xff]
      %v264 = vld [vmem:[%s217 + $0xb8] sm:$0xff]
      %v265 = vld [vmem:[%s217 + $0xc0] sm:$0xff]
      %v266 = vld [vmem:[%s217 + $0xc8] sm:$0xff]
      %v267 = vld [vmem:[%s217 + $0xd0] sm:$0xff]
      %v268 = vld [vmem:[%s217 + $0xd8] sm:$0xff]
      %v269 = vld [vmem:[%s217 + $0xe0] sm:$0xff]
      %v270 = vld [vmem:[%s217 + $0xe8] sm:$0xff]
      %v271 = vld [vmem:[%s217 + $0xf0] sm:$0xff]
      %v272 = vld [vmem:[%s217 + $0xf8] sm:$0xff]
      %v273 = vld [vmem:[%s217 + $0x100] sm:$0xff]
      %v274 = vld [vmem:[%s217 + $0x108] sm:$0xff]
      %v275 = vld [vmem:[%s217 + $0x110] sm:$0xff]
      %v276 = vld [vmem:[%s217 + $0x118] sm:$0xff]
      %v277 = vld [vmem:[%s217 + $0x120] sm:$0xff]
      %v278 = vld [vmem:[%s217 + $0x128] sm:$0xff]
      %v279 = vld [vmem:[%s217 + $0x130] sm:$0xff]
      %v280 = vld [vmem:[%s217 + $0x138] sm:$0xff]
      %v281 = vld [vmem:[%s217 + $0x140] sm:$0xff]
      %v282 = vld [vmem:[%s217 + $0x148] sm:$0xff]
      %v283 = vld [vmem:[%s217 + $0x150] sm:$0xff]
      %v284 = vld [vmem:[%s217 + $0x158] sm:$0xff]
      %v285 = vld [vmem:[%s222] sm:$0xff]
      %v286 = vld [vmem:[%s222 + $0x8] sm:$0xff]
      %v287 = vld [vmem:[%s222 + $0x10] sm:$0xff]
      %v288 = vld [vmem:[%s222 + $0x18] sm:$0xff]
      %v289 = vld [vmem:[%s222 + $0x20] sm:$0xff]
      %v290 = vld [vmem:[%s222 + $0x28] sm:$0xff]
      %v291 = vld [vmem:[%s222 + $0x30] sm:$0xff]
      %v292 = vld [vmem:[%s222 + $0x38] sm:$0xff]
      %v293 = vld [vmem:[%s222 + $0x40] sm:$0xff]
      %v294 = vld [vmem:[%s222 + $0x48] sm:$0xff]
      %v295 = vld [vmem:[%s222 + $0x50] sm:$0xff]
      %v296 = vld [vmem:[%s222 + $0x58] sm:$0xff]
      %v297 = vld [vmem:[%s222 + $0x60] sm:$0xff]
      %v298 = vld [vmem:[%s222 + $0x68] sm:$0xff]
      %v299 = vld [vmem:[%s222 + $0x70] sm:$0xff]
      %v300 = vld [vmem:[%s222 + $0x78] sm:$0xff]
      %v301 = vld [vmem:[%s222 + $0x80] sm:$0xff]
      %v302 = vld [vmem:[%s222 + $0x88] sm:$0xff]
      %v303 = vld [vmem:[%s222 + $0x90] sm:$0xff]
      %v304 = vld [vmem:[%s222 + $0x98] sm:$0xff]
      %v305 = vld [vmem:[%s222 + $0xa0] sm:$0xff]
      %v306 = vld [vmem:[%s222 + $0xa8] sm:$0xff]
      %v307 = vld [vmem:[%s222 + $0xb0] sm:$0xff]
      %v308 = vld [vmem:[%s222 + $0xb8] sm:$0xff]
      %v309 = vld [vmem:[%s222 + $0xc0] sm:$0xff]
      %v310 = vld [vmem:[%s222 + $0xc8] sm:$0xff]
      %v311 = vld [vmem:[%s222 + $0xd0] sm:$0xff]
      %v312 = vld [vmem:[%s222 + $0xd8] sm:$0xff]
      %v313 = vld [vmem:[%s222 + $0xe0] sm:$0xff]
      %v314 = vld [vmem:[%s222 + $0xe8] sm:$0xff]
      %v315 = vld [vmem:[%s222 + $0xf0] sm:$0xff]
      %v316 = vld [vmem:[%s222 + $0xf8] sm:$0xff]
      %v317 = vld [vmem:[%s222 + $0x100] sm:$0xff]
      %v318 = vld [vmem:[%s222 + $0x108] sm:$0xff]
      %v319 = vld [vmem:[%s222 + $0x110] sm:$0xff]
      %v320 = vld [vmem:[%s222 + $0x118] sm:$0xff]
      %v321 = vld [vmem:[%s222 + $0x120] sm:$0xff]
      %v322 = vld [vmem:[%s222 + $0x128] sm:$0xff]
      %v323 = vld [vmem:[%s222 + $0x130] sm:$0xff]
      %v324 = vld [vmem:[%s222 + $0x138] sm:$0xff]
      %v325 = vld [vmem:[%s222 + $0x140] sm:$0xff]
      %v326 = vld [vmem:[%s222 + $0x148] sm:$0xff]
      %v327 = vld [vmem:[%s222 + $0x150] sm:$0xff]
      %v328 = vld [vmem:[%s222 + $0x158] sm:$0xff]
      %v329 = vadd.f32 %v241, %v285
      %v330 = vadd.f32 %v242, %v286
      %v331 = vadd.f32 %v243, %v287
      %v332 = vadd.f32 %v244, %v288
      %v333 = vadd.f32 %v245, %v289
      %v334 = vadd.f32 %v246, %v290
      %v335 = vadd.f32 %v247, %v291
      %v336 = vadd.f32 %v248, %v292
      %v337 = vadd.f32 %v249, %v293
      %v338 = vadd.f32 %v250, %v294
      %v339 = vadd.f32 %v251, %v295
      %v340 = vadd.f32 %v252, %v296
      %v341 = vadd.f32 %v253, %v297
      %v342 = vadd.f32 %v254, %v298
      %v343 = vadd.f32 %v255, %v299
      %v344 = vadd.f32 %v256, %v300
      %v345 = vadd.f32 %v257, %v301
      %v346 = vadd.f32 %v258, %v302
      %v347 = vadd.f32 %v259, %v303
      %v348 = vadd.f32 %v260, %v304
      %v349 = vadd.f32 %v261, %v305
      %v350 = vadd.f32 %v262, %v306
      %v351 = vadd.f32 %v263, %v307
      %v352 = vadd.f32 %v264, %v308
      %v353 = vadd.f32 %v265, %v309
      %v354 = vadd.f32 %v266, %v310
      %v355 = vadd.f32 %v267, %v311
      %v356 = vadd.f32 %v268, %v312
      %v357 = vadd.f32 %v269, %v313
      %v358 = vadd.f32 %v270, %v314
      %v359 = vadd.f32 %v271, %v315
      %v360 = vadd.f32 %v272, %v316
      %v361 = vadd.f32 %v273, %v317
      %v362 = vadd.f32 %v274, %v318
      %v363 = vadd.f32 %v275, %v319
      %v364 = vadd.f32 %v276, %v320
      %v365 = vadd.f32 %v277, %v321
      %v366 = vadd.f32 %v278, %v322
      %v367 = vadd.f32 %v279, %v323
      %v368 = vadd.f32 %v280, %v324
      %v369 = vadd.f32 %v281, %v325
      %v370 = vadd.f32 %v282, %v326
      %v371 = vadd.f32 %v283, %v327
      %v372 = vadd.f32 %v284, %v328
      %v373 = vld [vmem:[%s228] sm:$0xff]
      %v374 = vld [vmem:[%s228 + $0x8] sm:$0xff]
      %v375 = vld [vmem:[%s228 + $0x10] sm:$0xff]
      %v376 = vld [vmem:[%s228 + $0x18] sm:$0xff]
      %v377 = vld [vmem:[%s228 + $0x20] sm:$0xff]
      %v378 = vld [vmem:[%s228 + $0x28] sm:$0xff]
      %v379 = vld [vmem:[%s228 + $0x30] sm:$0xff]
      %v380 = vld [vmem:[%s228 + $0x38] sm:$0xff]
      %v381 = vld [vmem:[%s228 + $0x40] sm:$0xff]
      %v382 = vld [vmem:[%s228 + $0x48] sm:$0xff]
      %v383 = vld [vmem:[%s228 + $0x50] sm:$0xff]
      %v384 = vld [vmem:[%s228 + $0x58] sm:$0xff]
      %v385 = vld [vmem:[%s228 + $0x60] sm:$0xff]
      %v386 = vld [vmem:[%s228 + $0x68] sm:$0xff]
      %v387 = vld [vmem:[%s228 + $0x70] sm:$0xff]
      %v388 = vld [vmem:[%s228 + $0x78] sm:$0xff]
      %v389 = vld [vmem:[%s228 + $0x80] sm:$0xff]
      %v390 = vld [vmem:[%s228 + $0x88] sm:$0xff]
      %v391 = vld [vmem:[%s228 + $0x90] sm:$0xff]
      %v392 = vld [vmem:[%s228 + $0x98] sm:$0xff]
      %v393 = vld [vmem:[%s228 + $0xa0] sm:$0xff]
      %v394 = vld [vmem:[%s228 + $0xa8] sm:$0xff]
      %v395 = vld [vmem:[%s228 + $0xb0] sm:$0xff]
      %v396 = vld [vmem:[%s228 + $0xb8] sm:$0xff]
      %v397 = vld [vmem:[%s228 + $0xc0] sm:$0xff]
      %v398 = vld [vmem:[%s228 + $0xc8] sm:$0xff]
      %v399 = vld [vmem:[%s228 + $0xd0] sm:$0xff]
      %v400 = vld [vmem:[%s228 + $0xd8] sm:$0xff]
      %v401 = vld [vmem:[%s228 + $0xe0] sm:$0xff]
      %v402 = vld [vmem:[%s228 + $0xe8] sm:$0xff]
      %v403 = vld [vmem:[%s228 + $0xf0] sm:$0xff]
      %v404 = vld [vmem:[%s228 + $0xf8] sm:$0xff]
      %v405 = vld [vmem:[%s228 + $0x100] sm:$0xff]
      %v406 = vld [vmem:[%s228 + $0x108] sm:$0xff]
      %v407 = vld [vmem:[%s228 + $0x110] sm:$0xff]
      %v408 = vld [vmem:[%s228 + $0x118] sm:$0xff]
      %v409 = vld [vmem:[%s228 + $0x120] sm:$0xff]
      %v410 = vld [vmem:[%s228 + $0x128] sm:$0xff]
      %v411 = vld [vmem:[%s228 + $0x130] sm:$0xff]
      %v412 = vld [vmem:[%s228 + $0x138] sm:$0xff]
      %v413 = vld [vmem:[%s228 + $0x140] sm:$0xff]
      %v414 = vld [vmem:[%s228 + $0x148] sm:$0xff]
      %v415 = vld [vmem:[%s228 + $0x150] sm:$0xff]
      %v416 = vld [vmem:[%s228 + $0x158] sm:$0xff]
      %v417 = vld [vmem:[%s228 + $0x160] sm:$0xff]
      %v418 = vld [vmem:[%s228 + $0x168] sm:$0xff]
      %v419 = vld [vmem:[%s228 + $0x170] sm:$0xff]
      %v420 = vld [vmem:[%s228 + $0x178] sm:$0xff]
      %v421 = vld [vmem:[%s228 + $0x180] sm:$0xff]
      %v422 = vld [vmem:[%s228 + $0x188] sm:$0xff]
      %v423 = vld [vmem:[%s228 + $0x190] sm:$0xff]
      %v424 = vld [vmem:[%s228 + $0x198] sm:$0xff]
      %v425 = vld [vmem:[%s228 + $0x1a0] sm:$0xff]
      %v426 = vld [vmem:[%s228 + $0x1a8] sm:$0xff]
      %v427 = vld [vmem:[%s228 + $0x1b0] sm:$0xff]
      %v428 = vld [vmem:[%s228 + $0x1b8] sm:$0xff]
      %v429 = vld [vmem:[%s228 + $0x1c0] sm:$0xff]
      %v430 = vld [vmem:[%s228 + $0x1c8] sm:$0xff]
      %v431 = vld [vmem:[%s228 + $0x1d0] sm:$0xff]
      %v432 = vld [vmem:[%s228 + $0x1d8] sm:$0xff]
      %v433 = vld [vmem:[%s228 + $0x1e0] sm:$0xff]
      %v434 = vld [vmem:[%s228 + $0x1e8] sm:$0xff]
      %v435 = vld [vmem:[%s228 + $0x1f0] sm:$0xff]
      %v436 = vld [vmem:[%s228 + $0x1f8] sm:$0xff]
      %v437 = vld [vmem:[%s228 + $0x200] sm:$0xff]
      %v438 = vld [vmem:[%s228 + $0x208] sm:$0xff]
      %vm439 = vcmask 392192
      %v441 = vsel %vm439, %v374, 0
      %v444 = vsel %vm439, %v376, 0
      %v447 = vsel %vm439, %v378, 0
      %v450 = vsel %vm439, %v380, 0
      %v453 = vsel %vm439, %v382, 0
      %v456 = vsel %vm439, %v384, 0
      %v459 = vsel %vm439, %v386, 0
      %v462 = vsel %vm439, %v388, 0
      %v465 = vsel %vm439, %v390, 0
      %v468 = vsel %vm439, %v392, 0
      %v471 = vsel %vm439, %v394, 0
      %v474 = vsel %vm439, %v396, 0
      %v477 = vsel %vm439, %v398, 0
      %v480 = vsel %vm439, %v400, 0
      %v483 = vsel %vm439, %v402, 0
      %v486 = vsel %vm439, %v404, 0
      %v489 = vsel %vm439, %v406, 0
      %v492 = vsel %vm439, %v408, 0
      %v495 = vsel %vm439, %v410, 0
      %v498 = vsel %vm439, %v412, 0
      %v501 = vsel %vm439, %v414, 0
      %v504 = vsel %vm439, %v416, 0
      %v507 = vsel %vm439, %v418, 0
      %v510 = vsel %vm439, %v420, 0
      %v513 = vsel %vm439, %v422, 0
      %v516 = vsel %vm439, %v424, 0
      %v519 = vsel %vm439, %v426, 0
      %v522 = vsel %vm439, %v428, 0
      %v525 = vsel %vm439, %v430, 0
      %v528 = vsel %vm439, %v432, 0
      %v531 = vsel %vm439, %v434, 0
      %v534 = vsel %vm439, %v436, 0
      %v537 = vsel %vm439, %v438, 0
      %539 = vmatpush.msra.mxu0 %v359
      %540 = vmatpush.msra.mxu0 %v357
      %541 = vmatpush.msra.mxu0 %v355
      %542 = vmatpush.msra.mxu0 %v353
      %543 = vmatpush.msra.mxu0 %v351
      %544 = vmatpush.msra.mxu0 %v349
      %545 = vmatpush.msra.mxu0 %v347
      %546 = vmatpush.msra.mxu0 %v345
      %547 = vmatpush.msra.mxu0 %v343
      %548 = vmatpush.msra.mxu0 %v341
      %549 = vmatpush.msra.mxu0 %v339
      %550 = vmatpush.msra.mxu0 %v337
      %551 = vmatpush.msra.mxu0 %v335
      %552 = vmatpush.msra.mxu0 %v333
      %553 = vmatpush.msra.mxu0 %v331
      %554 = vmatpush.msra.mxu0 %v329
      %555 = vmatmul.f32.gmra.mxu0 %v373
      %v556 = vpop.f32.mrf.mxu0
      %v557 = vadd.f32 0.0, %v556
      %558 = vmatmul.f32.gmra.mxu0 %v375
      %v559 = vpop.f32.mrf.mxu0
      %v560 = vadd.f32 0.0, %v559
      %561 = vmatmul.f32.gmra.mxu0 %v377
      %v562 = vpop.f32.mrf.mxu0
      %v563 = vadd.f32 0.0, %v562
      %564 = vmatmul.f32.gmra.mxu0 %v379
      %v565 = vpop.f32.mrf.mxu0
      %v566 = vadd.f32 0.0, %v565
      %567 = vmatmul.f32.gmra.mxu0 %v381
      %v568 = vpop.f32.mrf.mxu0
      %v569 = vadd.f32 0.0, %v568
      %570 = vmatmul.f32.gmra.mxu0 %v383
      %v571 = vpop.f32.mrf.mxu0
      %v572 = vadd.f32 0.0, %v571
      %573 = vmatmul.f32.gmra.mxu0 %v385
      %v574 = vpop.f32.mrf.mxu0
      %v575 = vadd.f32 0.0, %v574
      %576 = vmatmul.f32.gmra.mxu0 %v387
      %v577 = vpop.f32.mrf.mxu0
      %v578 = vadd.f32 0.0, %v577
      %579 = vmatmul.f32.gmra.mxu0 %v389
      %v580 = vpop.f32.mrf.mxu0
      %v581 = vadd.f32 0.0, %v580
      %582 = vmatmul.f32.gmra.mxu0 %v391
      %v583 = vpop.f32.mrf.mxu0
      %v584 = vadd.f32 0.0, %v583
      %585 = vmatmul.f32.gmra.mxu0 %v393
      %v586 = vpop.f32.mrf.mxu0
      %v587 = vadd.f32 0.0, %v586
      %588 = vmatmul.f32.gmra.mxu0 %v395
      %v589 = vpop.f32.mrf.mxu0
      %v590 = vadd.f32 0.0, %v589
      %591 = vmatmul.f32.gmra.mxu0 %v397
      %v592 = vpop.f32.mrf.mxu0
      %v593 = vadd.f32 0.0, %v592
      %594 = vmatmul.f32.gmra.mxu0 %v399
      %v595 = vpop.f32.mrf.mxu0
      %v596 = vadd.f32 0.0, %v595
      %597 = vmatmul.f32.gmra.mxu0 %v401
      %v598 = vpop.f32.mrf.mxu0
      %v599 = vadd.f32 0.0, %v598
      %600 = vmatmul.f32.gmra.mxu0 %v403
      %v601 = vpop.f32.mrf.mxu0
      %v602 = vadd.f32 0.0, %v601
      %603 = vmatmul.f32.gmra.mxu0 %v405
      %v604 = vpop.f32.mrf.mxu0
      %v605 = vadd.f32 0.0, %v604
      %606 = vmatmul.f32.gmra.mxu0 %v407
      %v607 = vpop.f32.mrf.mxu0
      %v608 = vadd.f32 0.0, %v607
      %609 = vmatmul.f32.gmra.mxu0 %v409
      %v610 = vpop.f32.mrf.mxu0
      %v611 = vadd.f32 0.0, %v610
      %612 = vmatmul.f32.gmra.mxu0 %v411
      %v613 = vpop.f32.mrf.mxu0
      %v614 = vadd.f32 0.0, %v613
      %615 = vmatmul.f32.gmra.mxu0 %v413
      %v616 = vpop.f32.mrf.mxu0
      %v617 = vadd.f32 0.0, %v616
      %618 = vmatmul.f32.gmra.mxu0 %v415
      %v619 = vpop.f32.mrf.mxu0
      %v620 = vadd.f32 0.0, %v619
      %621 = vmatmul.f32.gmra.mxu0 %v417
      %v622 = vpop.f32.mrf.mxu0
      %v623 = vadd.f32 0.0, %v622
      %624 = vmatmul.f32.gmra.mxu0 %v419
      %v625 = vpop.f32.mrf.mxu0
      %v626 = vadd.f32 0.0, %v625
      %627 = vmatmul.f32.gmra.mxu0 %v421
      %v628 = vpop.f32.mrf.mxu0
      %v629 = vadd.f32 0.0, %v628
      %630 = vmatmul.f32.gmra.mxu0 %v423
      %v631 = vpop.f32.mrf.mxu0
      %v632 = vadd.f32 0.0, %v631
      %633 = vmatmul.f32.gmra.mxu0 %v425
      %v634 = vpop.f32.mrf.mxu0
      %v635 = vadd.f32 0.0, %v634
      %636 = vmatmul.f32.gmra.mxu0 %v427
      %v637 = vpop.f32.mrf.mxu0
      %v638 = vadd.f32 0.0, %v637
      %639 = vmatmul.f32.gmra.mxu0 %v429
      %v640 = vpop.f32.mrf.mxu0
      %v641 = vadd.f32 0.0, %v640
      %642 = vmatmul.f32.gmra.mxu0 %v431
      %v643 = vpop.f32.mrf.mxu0
      %v644 = vadd.f32 0.0, %v643
      %645 = vmatmul.f32.gmra.mxu0 %v433
      %v646 = vpop.f32.mrf.mxu0
      %v647 = vadd.f32 0.0, %v646
      %648 = vmatmul.f32.gmra.mxu0 %v435
      %v649 = vpop.f32.mrf.mxu0
      %v650 = vadd.f32 0.0, %v649
      %651 = vmatmul.f32.gmra.mxu0 %v437
      %v652 = vpop.f32.mrf.mxu0
      %v653 = vadd.f32 0.0, %v652
      %654 = vdwg.mxu0
      %655 = vmatpush.msra.mxu0 0.0
      %656 = vmatpush.msra.mxu0 0.0
      %657 = vmatpush.msra.mxu0 0.0
      %658 = vmatpush.msra.mxu0 0.0
      %659 = vmatpush.msra.mxu0 0.0
      %660 = vmatpush.msra.mxu0 0.0
      %661 = vmatpush.msra.mxu0 0.0
      %662 = vmatpush.msra.mxu0 0.0
      %663 = vmatpush.msra.mxu0 0.0
      %664 = vmatpush.msra.mxu0 0.0
      %665 = vmatpush.msra.mxu0 %v371
      %666 = vmatpush.msra.mxu0 %v369
      %667 = vmatpush.msra.mxu0 %v367
      %668 = vmatpush.msra.mxu0 %v365
      %669 = vmatpush.msra.mxu0 %v363
      %670 = vmatpush.msra.mxu0 %v361
      %671 = vmatmul.f32.gmra.mxu0 %v441
      %v672 = vpop.f32.mrf.mxu0
      %v673 = vadd.f32 %v557, %v672
      %674 = vmatmul.f32.gmra.mxu0 %v444
      %v675 = vpop.f32.mrf.mxu0
      %v676 = vadd.f32 %v560, %v675
      %677 = vmatmul.f32.gmra.mxu0 %v447
      %v678 = vpop.f32.mrf.mxu0
      %v679 = vadd.f32 %v563, %v678
      %680 = vmatmul.f32.gmra.mxu0 %v450
      %v681 = vpop.f32.mrf.mxu0
      %v682 = vadd.f32 %v566, %v681
      %683 = vmatmul.f32.gmra.mxu0 %v453
      %v684 = vpop.f32.mrf.mxu0
      %v685 = vadd.f32 %v569, %v684
      %686 = vmatmul.f32.gmra.mxu0 %v456
      %v687 = vpop.f32.mrf.mxu0
      %v688 = vadd.f32 %v572, %v687
      %689 = vmatmul.f32.gmra.mxu0 %v459
      %v690 = vpop.f32.mrf.mxu0
      %v691 = vadd.f32 %v575, %v690
      %692 = vmatmul.f32.gmra.mxu0 %v462
      %v693 = vpop.f32.mrf.mxu0
      %v694 = vadd.f32 %v578, %v693
      %695 = vmatmul.f32.gmra.mxu0 %v465
      %v696 = vpop.f32.mrf.mxu0
      %v697 = vadd.f32 %v581, %v696
      %698 = vmatmul.f32.gmra.mxu0 %v468
      %v699 = vpop.f32.mrf.mxu0
      %v700 = vadd.f32 %v584, %v699
      %701 = vmatmul.f32.gmra.mxu0 %v471
      %v702 = vpop.f32.mrf.mxu0
      %v703 = vadd.f32 %v587, %v702
      %704 = vmatmul.f32.gmra.mxu0 %v474
      %v705 = vpop.f32.mrf.mxu0
      %v706 = vadd.f32 %v590, %v705
      %707 = vmatmul.f32.gmra.mxu0 %v477
      %v708 = vpop.f32.mrf.mxu0
      %v709 = vadd.f32 %v593, %v708
      %710 = vmatmul.f32.gmra.mxu0 %v480
      %v711 = vpop.f32.mrf.mxu0
      %v712 = vadd.f32 %v596, %v711
      %713 = vmatmul.f32.gmra.mxu0 %v483
      %v714 = vpop.f32.mrf.mxu0
      %v715 = vadd.f32 %v599, %v714
      %716 = vmatmul.f32.gmra.mxu0 %v486
      %v717 = vpop.f32.mrf.mxu0
      %v718 = vadd.f32 %v602, %v717
      %719 = vmatmul.f32.gmra.mxu0 %v489
      %v720 = vpop.f32.mrf.mxu0
      %v721 = vadd.f32 %v605, %v720
      %722 = vmatmul.f32.gmra.mxu0 %v492
      %v723 = vpop.f32.mrf.mxu0
      %v724 = vadd.f32 %v608, %v723
      %725 = vmatmul.f32.gmra.mxu0 %v495
      %v726 = vpop.f32.mrf.mxu0
      %v727 = vadd.f32 %v611, %v726
      %728 = vmatmul.f32.gmra.mxu0 %v498
      %v729 = vpop.f32.mrf.mxu0
      %v730 = vadd.f32 %v614, %v729
      %731 = vmatmul.f32.gmra.mxu0 %v501
      %v732 = vpop.f32.mrf.mxu0
      %v733 = vadd.f32 %v617, %v732
      %734 = vmatmul.f32.gmra.mxu0 %v504
      %v735 = vpop.f32.mrf.mxu0
      %v736 = vadd.f32 %v620, %v735
      %737 = vmatmul.f32.gmra.mxu0 %v507
      %v738 = vpop.f32.mrf.mxu0
      %v739 = vadd.f32 %v623, %v738
      %740 = vmatmul.f32.gmra.mxu0 %v510
      %v741 = vpop.f32.mrf.mxu0
      %v742 = vadd.f32 %v626, %v741
      %743 = vmatmul.f32.gmra.mxu0 %v513
      %v744 = vpop.f32.mrf.mxu0
      %v745 = vadd.f32 %v629, %v744
      %746 = vmatmul.f32.gmra.mxu0 %v516
      %v747 = vpop.f32.mrf.mxu0
      %v748 = vadd.f32 %v632, %v747
      %749 = vmatmul.f32.gmra.mxu0 %v519
      %v750 = vpop.f32.mrf.mxu0
      %v751 = vadd.f32 %v635, %v750
      %752 = vmatmul.f32.gmra.mxu0 %v522
      %v753 = vpop.f32.mrf.mxu0
      %v754 = vadd.f32 %v638, %v753
      %755 = vmatmul.f32.gmra.mxu0 %v525
      %v756 = vpop.f32.mrf.mxu0
      %v757 = vadd.f32 %v641, %v756
      %758 = vmatmul.f32.gmra.mxu0 %v528
      %v759 = vpop.f32.mrf.mxu0
      %v760 = vadd.f32 %v644, %v759
      %761 = vmatmul.f32.gmra.mxu0 %v531
      %v762 = vpop.f32.mrf.mxu0
      %v763 = vadd.f32 %v647, %v762
      %764 = vmatmul.f32.gmra.mxu0 %v534
      %v765 = vpop.f32.mrf.mxu0
      %v766 = vadd.f32 %v650, %v765
      %767 = vmatmul.f32.gmra.mxu0 %v537
      %v768 = vpop.f32.mrf.mxu0
      %v769 = vadd.f32 %v653, %v768
      %770 = vdwg.mxu0
      %771 = vmatpush.msra.mxu0 %v360
      %772 = vmatpush.msra.mxu0 %v358
      %773 = vmatpush.msra.mxu0 %v356
      %774 = vmatpush.msra.mxu0 %v354
      %775 = vmatpush.msra.mxu0 %v352
      %776 = vmatpush.msra.mxu0 %v350
      %777 = vmatpush.msra.mxu0 %v348
      %778 = vmatpush.msra.mxu0 %v346
      %779 = vmatpush.msra.mxu0 %v344
      %780 = vmatpush.msra.mxu0 %v342
      %781 = vmatpush.msra.mxu0 %v340
      %782 = vmatpush.msra.mxu0 %v338
      %783 = vmatpush.msra.mxu0 %v336
      %784 = vmatpush.msra.mxu0 %v334
      %785 = vmatpush.msra.mxu0 %v332
      %786 = vmatpush.msra.mxu0 %v330
      %787 = vmatmul.f32.gmra.mxu0 %v373
      %v788 = vpop.f32.mrf.mxu0
      %v789 = vadd.f32 0.0, %v788
      %790 = vmatmul.f32.gmra.mxu0 %v375
      %v791 = vpop.f32.mrf.mxu0
      %v792 = vadd.f32 0.0, %v791
      %793 = vmatmul.f32.gmra.mxu0 %v377
      %v794 = vpop.f32.mrf.mxu0
      %v795 = vadd.f32 0.0, %v794
      %796 = vmatmul.f32.gmra.mxu0 %v379
      %v797 = vpop.f32.mrf.mxu0
      %v798 = vadd.f32 0.0, %v797
      %799 = vmatmul.f32.gmra.mxu0 %v381
      %v800 = vpop.f32.mrf.mxu0
      %v801 = vadd.f32 0.0, %v800
      %802 = vmatmul.f32.gmra.mxu0 %v383
      %v803 = vpop.f32.mrf.mxu0
      %v804 = vadd.f32 0.0, %v803
      %805 = vmatmul.f32.gmra.mxu0 %v385
      %v806 = vpop.f32.mrf.mxu0
      %v807 = vadd.f32 0.0, %v806
      %808 = vmatmul.f32.gmra.mxu0 %v387
      %v809 = vpop.f32.mrf.mxu0
      %v810 = vadd.f32 0.0, %v809
      %811 = vmatmul.f32.gmra.mxu0 %v389
      %v812 = vpop.f32.mrf.mxu0
      %v813 = vadd.f32 0.0, %v812
      %814 = vmatmul.f32.gmra.mxu0 %v391
      %v815 = vpop.f32.mrf.mxu0
      %v816 = vadd.f32 0.0, %v815
      %817 = vmatmul.f32.gmra.mxu0 %v393
      %v818 = vpop.f32.mrf.mxu0
      %v819 = vadd.f32 0.0, %v818
      %820 = vmatmul.f32.gmra.mxu0 %v395
      %v821 = vpop.f32.mrf.mxu0
      %v822 = vadd.f32 0.0, %v821
      %823 = vmatmul.f32.gmra.mxu0 %v397
      %v824 = vpop.f32.mrf.mxu0
      %v825 = vadd.f32 0.0, %v824
      %826 = vmatmul.f32.gmra.mxu0 %v399
      %v827 = vpop.f32.mrf.mxu0
      %v828 = vadd.f32 0.0, %v827
      %829 = vmatmul.f32.gmra.mxu0 %v401
      %v830 = vpop.f32.mrf.mxu0
      %v831 = vadd.f32 0.0, %v830
      %832 = vmatmul.f32.gmra.mxu0 %v403
      %v833 = vpop.f32.mrf.mxu0
      %v834 = vadd.f32 0.0, %v833
      %835 = vmatmul.f32.gmra.mxu0 %v405
      %v836 = vpop.f32.mrf.mxu0
      %v837 = vadd.f32 0.0, %v836
      %838 = vmatmul.f32.gmra.mxu0 %v407
      %v839 = vpop.f32.mrf.mxu0
      %v840 = vadd.f32 0.0, %v839
      %841 = vmatmul.f32.gmra.mxu0 %v409
      %v842 = vpop.f32.mrf.mxu0
      %v843 = vadd.f32 0.0, %v842
      %844 = vmatmul.f32.gmra.mxu0 %v411
      %v845 = vpop.f32.mrf.mxu0
      %v846 = vadd.f32 0.0, %v845
      %847 = vmatmul.f32.gmra.mxu0 %v413
      %v848 = vpop.f32.mrf.mxu0
      %v849 = vadd.f32 0.0, %v848
      %850 = vmatmul.f32.gmra.mxu0 %v415
      %v851 = vpop.f32.mrf.mxu0
      %v852 = vadd.f32 0.0, %v851
      %853 = vmatmul.f32.gmra.mxu0 %v417
      %v854 = vpop.f32.mrf.mxu0
      %v855 = vadd.f32 0.0, %v854
      %856 = vmatmul.f32.gmra.mxu0 %v419
      %v857 = vpop.f32.mrf.mxu0
      %v858 = vadd.f32 0.0, %v857
      %859 = vmatmul.f32.gmra.mxu0 %v421
      %v860 = vpop.f32.mrf.mxu0
      %v861 = vadd.f32 0.0, %v860
      %862 = vmatmul.f32.gmra.mxu0 %v423
      %v863 = vpop.f32.mrf.mxu0
      %v864 = vadd.f32 0.0, %v863
      %865 = vmatmul.f32.gmra.mxu0 %v425
      %v866 = vpop.f32.mrf.mxu0
      %v867 = vadd.f32 0.0, %v866
      %868 = vmatmul.f32.gmra.mxu0 %v427
      %v869 = vpop.f32.mrf.mxu0
      %v870 = vadd.f32 0.0, %v869
      %871 = vmatmul.f32.gmra.mxu0 %v429
      %v872 = vpop.f32.mrf.mxu0
      %v873 = vadd.f32 0.0, %v872
      %874 = vmatmul.f32.gmra.mxu0 %v431
      %v875 = vpop.f32.mrf.mxu0
      %v876 = vadd.f32 0.0, %v875
      %877 = vmatmul.f32.gmra.mxu0 %v433
      %v878 = vpop.f32.mrf.mxu0
      %v879 = vadd.f32 0.0, %v878
      %880 = vmatmul.f32.gmra.mxu0 %v435
      %v881 = vpop.f32.mrf.mxu0
      %v882 = vadd.f32 0.0, %v881
      %883 = vmatmul.f32.gmra.mxu0 %v437
      %v884 = vpop.f32.mrf.mxu0
      %v885 = vadd.f32 0.0, %v884
      %886 = vdwg.mxu0
      %887 = vmatpush.msra.mxu0 0.0
      %888 = vmatpush.msra.mxu0 0.0
      %889 = vmatpush.msra.mxu0 0.0
      %890 = vmatpush.msra.mxu0 0.0
      %891 = vmatpush.msra.mxu0 0.0
      %892 = vmatpush.msra.mxu0 0.0
      %893 = vmatpush.msra.mxu0 0.0
      %894 = vmatpush.msra.mxu0 0.0
      %895 = vmatpush.msra.mxu0 0.0
      %896 = vmatpush.msra.mxu0 0.0
      %897 = vmatpush.msra.mxu0 %v372
      %898 = vmatpush.msra.mxu0 %v370
      %899 = vmatpush.msra.mxu0 %v368
      %900 = vmatpush.msra.mxu0 %v366
      %901 = vmatpush.msra.mxu0 %v364
      %902 = vmatpush.msra.mxu0 %v362
      %903 = vmatmul.f32.gmra.mxu0 %v441
      %v904 = vpop.f32.mrf.mxu0
      %v905 = vadd.f32 %v789, %v904
      %906 = vmatmul.f32.gmra.mxu0 %v444
      %v907 = vpop.f32.mrf.mxu0
      %v908 = vadd.f32 %v792, %v907
      %909 = vmatmul.f32.gmra.mxu0 %v447
      %v910 = vpop.f32.mrf.mxu0
      %v911 = vadd.f32 %v795, %v910
      %912 = vmatmul.f32.gmra.mxu0 %v450
      %v913 = vpop.f32.mrf.mxu0
      %v914 = vadd.f32 %v798, %v913
      %915 = vmatmul.f32.gmra.mxu0 %v453
      %v916 = vpop.f32.mrf.mxu0
      %v917 = vadd.f32 %v801, %v916
      %918 = vmatmul.f32.gmra.mxu0 %v456
      %v919 = vpop.f32.mrf.mxu0
      %v920 = vadd.f32 %v804, %v919
      %921 = vmatmul.f32.gmra.mxu0 %v459
      %v922 = vpop.f32.mrf.mxu0
      %v923 = vadd.f32 %v807, %v922
      %924 = vmatmul.f32.gmra.mxu0 %v462
      %v925 = vpop.f32.mrf.mxu0
      %v926 = vadd.f32 %v810, %v925
      %927 = vmatmul.f32.gmra.mxu0 %v465
      %v928 = vpop.f32.mrf.mxu0
      %v929 = vadd.f32 %v813, %v928
      %930 = vmatmul.f32.gmra.mxu0 %v468
      %v931 = vpop.f32.mrf.mxu0
      %v932 = vadd.f32 %v816, %v931
      %933 = vmatmul.f32.gmra.mxu0 %v471
      %v934 = vpop.f32.mrf.mxu0
      %v935 = vadd.f32 %v819, %v934
      %936 = vmatmul.f32.gmra.mxu0 %v474
      %v937 = vpop.f32.mrf.mxu0
      %v938 = vadd.f32 %v822, %v937
      %939 = vmatmul.f32.gmra.mxu0 %v477
      %v940 = vpop.f32.mrf.mxu0
      %v941 = vadd.f32 %v825, %v940
      %942 = vmatmul.f32.gmra.mxu0 %v480
      %v943 = vpop.f32.mrf.mxu0
      %v944 = vadd.f32 %v828, %v943
      %945 = vmatmul.f32.gmra.mxu0 %v483
      %v946 = vpop.f32.mrf.mxu0
      %v947 = vadd.f32 %v831, %v946
      %948 = vmatmul.f32.gmra.mxu0 %v486
      %v949 = vpop.f32.mrf.mxu0
      %v950 = vadd.f32 %v834, %v949
      %951 = vmatmul.f32.gmra.mxu0 %v489
      %v952 = vpop.f32.mrf.mxu0
      %v953 = vadd.f32 %v837, %v952
      %954 = vmatmul.f32.gmra.mxu0 %v492
      %v955 = vpop.f32.mrf.mxu0
      %v956 = vadd.f32 %v840, %v955
      %957 = vmatmul.f32.gmra.mxu0 %v495
      %v958 = vpop.f32.mrf.mxu0
      %v959 = vadd.f32 %v843, %v958
      %960 = vmatmul.f32.gmra.mxu0 %v498
      %v961 = vpop.f32.mrf.mxu0
      %v962 = vadd.f32 %v846, %v961
      %963 = vmatmul.f32.gmra.mxu0 %v501
      %v964 = vpop.f32.mrf.mxu0
      %v965 = vadd.f32 %v849, %v964
      %966 = vmatmul.f32.gmra.mxu0 %v504
      %v967 = vpop.f32.mrf.mxu0
      %v968 = vadd.f32 %v852, %v967
      %969 = vmatmul.f32.gmra.mxu0 %v507
      %v970 = vpop.f32.mrf.mxu0
      %v971 = vadd.f32 %v855, %v970
      %972 = vmatmul.f32.gmra.mxu0 %v510
      %v973 = vpop.f32.mrf.mxu0
      %v974 = vadd.f32 %v858, %v973
      %975 = vmatmul.f32.gmra.mxu0 %v513
      %v976 = vpop.f32.mrf.mxu0
      %v977 = vadd.f32 %v861, %v976
      %978 = vmatmul.f32.gmra.mxu0 %v516
      %v979 = vpop.f32.mrf.mxu0
      %v980 = vadd.f32 %v864, %v979
      %981 = vmatmul.f32.gmra.mxu0 %v519
      %v982 = vpop.f32.mrf.mxu0
      %v983 = vadd.f32 %v867, %v982
      %984 = vmatmul.f32.gmra.mxu0 %v522
      %v985 = vpop.f32.mrf.mxu0
      %v986 = vadd.f32 %v870, %v985
      %987 = vmatmul.f32.gmra.mxu0 %v525
      %v988 = vpop.f32.mrf.mxu0
      %v989 = vadd.f32 %v873, %v988
      %990 = vmatmul.f32.gmra.mxu0 %v528
      %v991 = vpop.f32.mrf.mxu0
      %v992 = vadd.f32 %v876, %v991
      %993 = vmatmul.f32.gmra.mxu0 %v531
      %v994 = vpop.f32.mrf.mxu0
      %v995 = vadd.f32 %v879, %v994
      %996 = vmatmul.f32.gmra.mxu0 %v534
      %v997 = vpop.f32.mrf.mxu0
      %v998 = vadd.f32 %v882, %v997
      %999 = vmatmul.f32.gmra.mxu0 %v537
      %v1000 = vpop.f32.mrf.mxu0
      %v1001 = vadd.f32 %v885, %v1000
      %1002 = vdwg.mxu0
      %1003 = vst [vmem:[%s239] sm:$0xff] %v673
      %vm1004 = vcmask 556032
      %1005 = vst.msk [vmem:[%s239 + $0x8] sm:$0xff] %vm1004, %v905
      %1006 = vst [vmem:[%s239 + $0x10] sm:$0xff] %v676
      %1007 = vst.msk [vmem:[%s239 + $0x18] sm:$0xff] %vm1004, %v908
      %1008 = vst [vmem:[%s239 + $0x20] sm:$0xff] %v679
      %1009 = vst.msk [vmem:[%s239 + $0x28] sm:$0xff] %vm1004, %v911
      %1010 = vst [vmem:[%s239 + $0x30] sm:$0xff] %v682
      %1011 = vst.msk [vmem:[%s239 + $0x38] sm:$0xff] %vm1004, %v914
      %1012 = vst [vmem:[%s239 + $0x40] sm:$0xff] %v685
      %1013 = vst.msk [vmem:[%s239 + $0x48] sm:$0xff] %vm1004, %v917
      %1014 = vst [vmem:[%s239 + $0x50] sm:$0xff] %v688
      %1015 = vst.msk [vmem:[%s239 + $0x58] sm:$0xff] %vm1004, %v920
      %1016 = vst [vmem:[%s239 + $0x60] sm:$0xff] %v691
      %1017 = vst.msk [vmem:[%s239 + $0x68] sm:$0xff] %vm1004, %v923
      %1018 = vst [vmem:[%s239 + $0x70] sm:$0xff] %v694
      %1019 = vst.msk [vmem:[%s239 + $0x78] sm:$0xff] %vm1004, %v926
      %1020 = vst [vmem:[%s239 + $0x80] sm:$0xff] %v697
      %1021 = vst.msk [vmem:[%s239 + $0x88] sm:$0xff] %vm1004, %v929
      %1022 = vst [vmem:[%s239 + $0x90] sm:$0xff] %v700
      %1023 = vst.msk [vmem:[%s239 + $0x98] sm:$0xff] %vm1004, %v932
      %1024 = vst [vmem:[%s239 + $0xa0] sm:$0xff] %v703
      %1025 = vst.msk [vmem:[%s239 + $0xa8] sm:$0xff] %vm1004, %v935
      %1026 = vst [vmem:[%s239 + $0xb0] sm:$0xff] %v706
      %1027 = vst.msk [vmem:[%s239 + $0xb8] sm:$0xff] %vm1004, %v938
      %1028 = vst [vmem:[%s239 + $0xc0] sm:$0xff] %v709
      %1029 = vst.msk [vmem:[%s239 + $0xc8] sm:$0xff] %vm1004, %v941
      %1030 = vst [vmem:[%s239 + $0xd0] sm:$0xff] %v712
      %1031 = vst.msk [vmem:[%s239 + $0xd8] sm:$0xff] %vm1004, %v944
      %1032 = vst [vmem:[%s239 + $0xe0] sm:$0xff] %v715
      %1033 = vst.msk [vmem:[%s239 + $0xe8] sm:$0xff] %vm1004, %v947
      %1034 = vst [vmem:[%s239 + $0xf0] sm:$0xff] %v718
      %1035 = vst.msk [vmem:[%s239 + $0xf8] sm:$0xff] %vm1004, %v950
      %1036 = vst [vmem:[%s239 + $0x100] sm:$0xff] %v721
      %1037 = vst.msk [vmem:[%s239 + $0x108] sm:$0xff] %vm1004, %v953
      %1038 = vst [vmem:[%s239 + $0x110] sm:$0xff] %v724
      %1039 = vst.msk [vmem:[%s239 + $0x118] sm:$0xff] %vm1004, %v956
      %1040 = vst [vmem:[%s239 + $0x120] sm:$0xff] %v727
      %1041 = vst.msk [vmem:[%s239 + $0x128] sm:$0xff] %vm1004, %v959
      %1042 = vst [vmem:[%s239 + $0x130] sm:$0xff] %v730
      %1043 = vst.msk [vmem:[%s239 + $0x138] sm:$0xff] %vm1004, %v962
      %1044 = vst [vmem:[%s239 + $0x140] sm:$0xff] %v733
      %1045 = vst.msk [vmem:[%s239 + $0x148] sm:$0xff] %vm1004, %v965
      %1046 = vst [vmem:[%s239 + $0x150] sm:$0xff] %v736
      %1047 = vst.msk [vmem:[%s239 + $0x158] sm:$0xff] %vm1004, %v968
      %1048 = vst [vmem:[%s239 + $0x160] sm:$0xff] %v739
      %1049 = vst.msk [vmem:[%s239 + $0x168] sm:$0xff] %vm1004, %v971
      %1050 = vst [vmem:[%s239 + $0x170] sm:$0xff] %v742
      %1051 = vst.msk [vmem:[%s239 + $0x178] sm:$0xff] %vm1004, %v974
      %1052 = vst [vmem:[%s239 + $0x180] sm:$0xff] %v745
      %1053 = vst.msk [vmem:[%s239 + $0x188] sm:$0xff] %vm1004, %v977
      %1054 = vst [vmem:[%s239 + $0x190] sm:$0xff] %v748
      %1055 = vst.msk [vmem:[%s239 + $0x198] sm:$0xff] %vm1004, %v980
      %1056 = vst [vmem:[%s239 + $0x1a0] sm:$0xff] %v751
      %1057 = vst.msk [vmem:[%s239 + $0x1a8] sm:$0xff] %vm1004, %v983
      %1058 = vst [vmem:[%s239 + $0x1b0] sm:$0xff] %v754
      %1059 = vst.msk [vmem:[%s239 + $0x1b8] sm:$0xff] %vm1004, %v986
      %1060 = vst [vmem:[%s239 + $0x1c0] sm:$0xff] %v757
      %1061 = vst.msk [vmem:[%s239 + $0x1c8] sm:$0xff] %vm1004, %v989
      %1062 = vst [vmem:[%s239 + $0x1d0] sm:$0xff] %v760
      %1063 = vst.msk [vmem:[%s239 + $0x1d8] sm:$0xff] %vm1004, %v992
      %1064 = vst [vmem:[%s239 + $0x1e0] sm:$0xff] %v763
      %1065 = vst.msk [vmem:[%s239 + $0x1e8] sm:$0xff] %vm1004, %v995
      %1066 = vst [vmem:[%s239 + $0x1f0] sm:$0xff] %v766
      %1067 = vst.msk [vmem:[%s239 + $0x1f8] sm:$0xff] %vm1004, %v998
      %1068 = vst [vmem:[%s239 + $0x200] sm:$0xff] %v769
      %1069 = vst.msk [vmem:[%s239 + $0x208] sm:$0xff] %vm1004, %v1001
      %s1070 = smul.u32 33, %s19
      %p1071 = scmp.lt.s32.totalorder %s18, 0
      %s1072 = scalar_select %p1071, %s18, 0
      %p1073 = scmp.lt.s32.totalorder %s1070, 131
      %s1074 = scalar_select %p1073, %s1070, 131
      %s1075 = smul.addr %s1074, 2
      %s1076 = smul.addr %s1072, 264
      %s1077 = sadd.s32 %s1075, %s1076
      %s1078 = smul.addr %s1077, 8
      %s1079 = scalar_lea.vmem %s3, %s1078
      // Predicated region
      $region33: #{tpu_custom_call.1} parent=31 // pred_check
        %p1080 = pneg %p124
      $region34: #{tpu_custom_call.1} parent=31 // pred_check_branch
        %1082 = sbr.rel (%p1080) target = $region36
      $region35: #{tpu_custom_call.1} parent=31 // pred_region
        %s1083 = smul.u32 33, %s19
      $region36: #{tpu_custom_call.1} parent=31 // pred_fallthru
        _
    $region32: #{tpu_custom_call.1} parent=5 // pred_fallthru
      _
    %p1084 = scmp.le.s32.totalorder 2, %s9
    // Predicated region
    $region37: #{tpu_custom_call.1} parent=5 // pred_check
      %p1085 = pneg %p1084
    $region38: #{tpu_custom_call.1} parent=5 // pred_check_branch
      %1087 = sbr.rel (%p1085) target = $region40
    $region39: #{tpu_custom_call.1} parent=5 // pred_region
      %s1088 = ssub.s32 %s9, 2
      // Predicated region
      $region41: #{tpu_custom_call.1} parent=39 // pred_check
        %p1089 = pneg %p130
      $region42: #{tpu_custom_call.1} parent=39 // pred_check_branch
        %1091 = sbr.rel (%p1089) target = $region44
      $region43: #{tpu_custom_call.1} parent=39 // pred_region
        %s1092 = smul.u32 33, %s21
        %p1093 = scmp.lt.s32.totalorder %s20, 0
        %s1094 = scalar_select %p1093, %s20, 0
        %p1095 = scmp.lt.s32.totalorder %s1092, 131
        %s1096 = scalar_select %p1095, %s1092, 131
        %s1097 = smul.addr %s1096, 2
        %s1098 = smul.addr %s1094, 264
        %s1099 = sadd.s32 %s1097, %s1098
        %s1100 = smul.addr %s1099, 8
        %s1101 = scalar_lea.vmem %s3, %s1100
      $region44: #{tpu_custom_call.1} parent=39 // pred_fallthru
        _
    $region40: #{tpu_custom_call.1} parent=5 // pred_fallthru
      _
  $region6: #{tpu_custom_call.1} parent=0 // loop_footer
    %s13 = sadd.s32 1, %s9
  $region7: #{tpu_custom_call.1} parent=0 // loop_footer_branch
    %8 = sbr.rel target = $region3
  $region8: #{tpu_custom_call.1} parent=0 // loop_exit
    _

</llo_original>
